<compile_context>
chip_gen: v6e
topology: v6e:2x2x1
jax: 0.10.0
libtpu: 0.0.40
codegen_flags: <defaults>
</compile_context>

<pallas_src>
import math

import jax
import jax.numpy as jnp
from jax.experimental import pallas as pl
from jax.experimental.pallas import tpu as pltpu


NEG_SLOPE = 0.01   # PyTorch nn.LeakyReLU() default
LANE = 128


def _round_up(v, m):
    return ((v + m - 1) // m) * m


# ---------------------------------------------------------------------------
# Kernel
# ---------------------------------------------------------------------------
def mlp_kernel(x_ref, w1_ref, b1_ref, w2_ref, b2_ref, w3_ref, b3_ref, o_ref):
    """Fused 3-layer MLP on one (TB, n_in) batch tile.

    x arrives as f32 straight from HBM and is cast to bf16 here (VPU).
    Weights are bf16 (MXU-native), biases f32; every dot accumulates in f32
    and the bias add / LeakyReLU run on the f32 accumulator."""
    x = x_ref[...].astype(jnp.bfloat16)                     # (TB, n_in)

    # Layer 0: FC + LeakyReLU      (TB, n_in) @ (n_in, Hp)
    h = jnp.dot(x, w1_ref[...], preferred_element_type=jnp.float32)
    h = h + b1_ref[...]                                     # (TB, Hp) + (1, Hp)
    h = jnp.where(h > 0, h, NEG_SLOPE * h)

    # Layer 1: FC + LeakyReLU      (TB, Hp) @ (Hp, Hp)
    h = jnp.dot(h.astype(jnp.bfloat16), w2_ref[...],
                preferred_element_type=jnp.float32)
    h = h + b2_ref[...]
    h = jnp.where(h > 0, h, NEG_SLOPE * h)

    # Layer 2: FC (no activation)  (TB, Hp) @ (Hp, Np)
    h = jnp.dot(h.astype(jnp.bfloat16), w3_ref[...],
                preferred_element_type=jnp.float32)
    h = h + b3_ref[...]

    o_ref[...] = h.astype(o_ref.dtype)                      # lane-dense bf16 store


# ---------------------------------------------------------------------------
# One-time parameter preparation (cache the result; do NOT run per call)
# ---------------------------------------------------------------------------
def prepare_kernel_params(params):
    """Pad hidden/output feature dims to lane multiples (128) and cast the
    weights to bf16 once.  Zero padding is exact: padded hidden units get a
    0 pre-activation, LeakyReLU(0)==0, and the corresponding zero weight rows
    contribute nothing downstream; padded output columns are sliced off in
    the wrapper.  Biases stay f32 (added to the f32 MXU accumulator)."""
    w1, b1, w2, b2, w3, b3 = (params["w1"], params["b1"], params["w2"],
                              params["b2"], params["w3"], params["b3"])
    n_in, H = w1.shape
    n_out = w3.shape[1]
    Hp = _round_up(H, LANE)
    Np = _round_up(n_out, LANE)
    bf16 = jnp.bfloat16
    return dict(
        w1=jnp.pad(w1, ((0, 0), (0, Hp - H))).astype(bf16),
        b1=jnp.pad(b1, ((0, 0), (0, Hp - H))),
        w2=jnp.pad(w2, ((0, Hp - H), (0, Hp - H))).astype(bf16),
        b2=jnp.pad(b2, ((0, 0), (0, Hp - H))),
        w3=jnp.pad(w3, ((0, Hp - H), (0, Np - n_out))).astype(bf16),
        b3=jnp.pad(b3, ((0, 0), (0, Np - n_out))),
        n_in=n_in, n_hidden=H, n_out=n_out, h_pad=Hp, n_pad=Np,
    )


# ---------------------------------------------------------------------------
# VMEM / tile sizing
# ---------------------------------------------------------------------------
def _vmem_cap_bytes():
    """Per-generation scoped-VMEM budget (physical: v5e/v6e 128 MiB/TC,
    v7x 64 MiB/TC)."""
    try:
        kind = jax.devices()[0].device_kind.lower()
    except Exception:
        kind = ""
    if "v2" in kind or "v3" in kind:
        return 12 * 1024 * 1024
    if "v4" in kind or "v5" in kind or "v6" in kind:
        return 100 * 1024 * 1024
    # v7x (64 MiB/TC) or unknown: be conservative.
    return 48 * 1024 * 1024


def _choose_batch_tile(B, n_in, Hp, Np, resident_bytes, budget_bytes, batch_tile):
    TB = min(batch_tile, _round_up(max(B, 8), 8))
    # v7x megacore: give both TensorCores a tile when the batch is big enough
    # (a single extra ~0.35 us grid step is harmless on v5e/v6e).
    if B > 16 and pl.cdiv(B, TB) < 2:
        TB = _round_up(pl.cdiv(B, 2), 8)

    def vmem_estimate(tb):
        x_tiles = 2 * tb * n_in * 4            # f32 input, double-buffered
        out_tiles = 2 * tb * Np * 2            # bf16 output, double-buffered
        live = tb * Hp * (4 + 4 + 2)           # f32 acc + f32 act + bf16 recast
        return resident_bytes + x_tiles + out_tiles + live

    # Shrink TB until the estimate fits the budget (weights assumed resident).
    # TODO(synk): if the resident weights alone exceed the budget (very large
    # n_hidden on v7x), the fusion should be split / K-tiled instead.
    while TB > 8 and vmem_estimate(TB) > budget_bytes:
        TB = _round_up(TB // 2, 8)
    return TB


# ---------------------------------------------------------------------------
# pallas_call wrapper
# ---------------------------------------------------------------------------
_WEIGHT_SINGLE_BUFFER_OK = [True]   # flipped off if pl.Buffered(1) is rejected


def _build_mlp_call(B, TB, n_in, Hp, Np, kp, single_buffer_weights, vmem_limit):
    if single_buffer_weights:
        def wspec(shape):
            # Constant index_map -> the block never re-DMAs; one buffer is enough.
            return pl.BlockSpec(shape, lambda i: (0,) * len(shape),
                                pipeline_mode=pl.Buffered(1))
    else:
        def wspec(shape):
            return pl.BlockSpec(shape, lambda i: (0,) * len(shape))

    w_bytes = (kp["w1"].size + kp["w2"].size + kp["w3"].size) * 2
    b_bytes = (kp["b1"].size + kp["b2"].size + kp["b3"].size) * 4
    flops = 2 * B * (n_in * Hp + Hp * Hp + Hp * Np)
    bytes_accessed = B * n_in * 4 + w_bytes + b_bytes + B * Np * 2

    return pl.pallas_call(
        mlp_kernel,
        out_shape=jax.ShapeDtypeStruct((B, Np), jnp.bfloat16),
        grid=(pl.cdiv(B, TB),),
        in_specs=[
            pl.BlockSpec((TB, n_in), lambda i: (i, 0)),      # x: batch-tiled f32
            wspec(kp["w1"].shape), wspec(kp["b1"].shape),    # weights VMEM-resident
            wspec(kp["w2"].shape), wspec(kp["b2"].shape),
            wspec(kp["w3"].shape), wspec(kp["b3"].shape),
        ],
        out_specs=pl.BlockSpec((TB, Np), lambda i: (i, 0)),
        compiler_params=pltpu.CompilerParams(
            dimension_semantics=("parallel",),               # megacore on v7x
            vmem_limit_bytes=int(vmem_limit),
        ),
        cost_estimate=pl.CostEstimate(
            flops=flops, transcendentals=0, bytes_accessed=bytes_accessed),
    )


def mlp_forward(x, kparams, *, batch_tile=1024):
    """x: (B, n_inputs) f32.  kparams: output of prepare_kernel_params."""
    B, n_in = x.shape
    assert n_in == kparams["n_in"], "input feature dim mismatch"
    Hp, Np = kparams["h_pad"], kparams["n_pad"]

    cap = _vmem_cap_bytes()
    resident = ((kparams["w1"].size + kparams["w2"].size + kparams["w3"].size) * 2
                + (kparams["b1"].size + kparams["b2"].size + kparams["b3"].size) * 4)
    # Budget as if weights were double-buffered so the fallback path also fits.
    TB = _choose_batch_tile(B, n_in, Hp, Np, 2 * resident, int(cap * 0.85),
                            batch_tile)

    args = (x, kparams["w1"], kparams["b1"], kparams["w2"], kparams["b2"],
            kparams["w3"], kparams["b3"])

    if _WEIGHT_SINGLE_BUFFER_OK[0]:
        try:
            out = _build_mlp_call(B, TB, n_in, Hp, Np, kparams, True, cap)(*args)
        except Exception:
            _WEIGHT_SINGLE_BUFFER_OK[0] = False
            out = _build_mlp_call(B, TB, n_in, Hp, Np, kparams, False, cap)(*args)
    else:
        out = _build_mlp_call(B, TB, n_in, Hp, Np, kparams, False, cap)(*args)

    # Slice off the lane padding; upcast the small (B, n_out) slab back to f32.
    return out[:, :kparams["n_out"]].astype(jnp.float32)


# ---------------------------------------------------------------------------
# Parameter construction (mirrors nn.Linear defaults) and references
# ---------------------------------------------------------------------------
def init_linear(key, n_in, n_out):
    """Deterministic init mirroring nn.Linear defaults.
    Returns weight transposed to (n_in, n_out) and bias shaped (1, n_out)."""
    kw, kb = jax.random.split(key)
    bound = 1.0 / math.sqrt(n_in)
    w = jax.random.uniform(kw, (n_in, n_out), jnp.float32, -bound, bound)
    b = jax.random.uniform(kb, (1, n_out), jnp.float32, -bound, bound)
    return w, b


def make_params(key, n_inputs, n_outputs, n_hidden):
    k1, k2, k3 = jax.random.split(key, 3)
    w1, b1 = init_linear(k1, n_inputs, n_hidden)
    w2, b2 = init_linear(k2, n_hidden, n_hidden)
    w3, b3 = init_linear(k3, n_hidden, n_outputs)
    return dict(w1=w1, b1=b1, w2=w2, b2=b2, w3=w3, b3=b3)


def mlp_reference_f32(x, p):
    """Pure f32 reference (matches the PyTorch module exactly)."""
    lrelu = lambda v: jnp.where(v > 0, v, NEG_SLOPE * v)
    h = lrelu(x @ p["w1"] + p["b1"])
    h = lrelu(h @ p["w2"] + p["b2"])
    return h @ p["w3"] + p["b3"]


def mlp_reference_bf16(x, p):
    """Reference with the same bf16-input / f32-accumulate / bf16-output
    numerics as the kernel."""
    bf = jnp.bfloat16
    lrelu = lambda v: jnp.where(v > 0, v, NEG_SLOPE * v)
    h = jnp.dot(x.astype(bf), p["w1"].astype(bf),
                preferred_element_type=jnp.float32) + p["b1"]
    h = lrelu(h)
    h = jnp.dot(h.astype(bf), p["w2"].astype(bf),
                preferred_element_type=jnp.float32) + p["b2"]
    h = lrelu(h)
    h = jnp.dot(h.astype(bf), p["w3"].astype(bf),
                preferred_element_type=jnp.float32) + p["b3"]
    return h.astype(bf).astype(jnp.float32)


# TODO(synk): spectral_norm (power-iteration weight normalization) is a
# parameterization applied at weight-construction time, not a forward-pass op;
# the spectral=False path is what is implemented here.

if __name__ == "__main__":
    key = jax.random.PRNGKey(0)
    kx, kp_key = jax.random.split(key)

    batch, n_inputs, n_hidden, n_outputs = 8, 16, 32, 4
    x = jax.random.normal(kx, (batch, n_inputs), jnp.float32)
    params = make_params(kp_key, n_inputs, n_outputs, n_hidden)

    # One-time weight prep (bf16 cast + lane padding), reused across calls.
    kparams = prepare_kernel_params(params)

    out = mlp_forward(x, kparams)
    out = jax.block_until_ready(out)
    assert out.shape == (batch, n_outputs)

    # Tight check against a reference with matching bf16 numerics.
    ref_bf16 = mlp_reference_bf16(x, params)
    assert jnp.allclose(out, ref_bf16, atol=2e-2, rtol=2e-2), (
        "mismatch vs bf16-matched reference")

    # Looser sanity check against the exact f32 PyTorch-equivalent math
    # (bf16 inputs/outputs perturb results at roughly the 1e-3..1e-2 level).
    ref_f32 = mlp_reference_f32(x, params)
    assert jnp.allclose(out, ref_f32, atol=6e-2, rtol=6e-2), (
        "mismatch vs f32 reference")

    print("KERNEL_OK")
</pallas_src>

<mosaic_0001>
module attributes {stable_mosaic.version = 11 : i64} {
  func.func @mlp_kernel(%arg0: i32, %arg1: memref<8x16xf32, #tpu.memory_space<vmem>>, %arg2: memref<16x128xbf16, #tpu.memory_space<vmem>>, %arg3: memref<1x128xf32, #tpu.memory_space<vmem>>, %arg4: memref<128x128xbf16, #tpu.memory_space<vmem>>, %arg5: memref<1x128xf32, #tpu.memory_space<vmem>>, %arg6: memref<128x128xbf16, #tpu.memory_space<vmem>>, %arg7: memref<1x128xf32, #tpu.memory_space<vmem>>, %arg8: memref<8x128xbf16, #tpu.memory_space<vmem>>) attributes {dimension_semantics = [#tpu.dimension_semantics<parallel>], iteration_bounds = array<i64: 1>, scalar_prefetch = 0 : i64, scratch_operands = 0 : i64, tpu.core_type = #tpu.core_type<tc>, window_params = [{transform_indices = @transform_0, window_bounds = array<i64: 8, 16>}, {pipeline_mode = #tpu.pipeline_mode<synchronous>, transform_indices = @transform_1, window_bounds = array<i64: 16, 128>}, {pipeline_mode = #tpu.pipeline_mode<synchronous>, transform_indices = @transform_2, window_bounds = array<i64: 1, 128>}, {pipeline_mode = #tpu.pipeline_mode<synchronous>, transform_indices = @transform_3, window_bounds = array<i64: 128, 128>}, {pipeline_mode = #tpu.pipeline_mode<synchronous>, transform_indices = @transform_4, window_bounds = array<i64: 1, 128>}, {pipeline_mode = #tpu.pipeline_mode<synchronous>, transform_indices = @transform_5, window_bounds = array<i64: 128, 128>}, {pipeline_mode = #tpu.pipeline_mode<synchronous>, transform_indices = @transform_6, window_bounds = array<i64: 1, 128>}, {transform_indices = @transform_7, window_bounds = array<i64: 8, 128>}]} {
    %c0 = arith.constant 0 : index
    %c0_0 = arith.constant 0 : index
    %0 = vector.load %arg1[%c0, %c0_0] : memref<8x16xf32, #tpu.memory_space<vmem>>, vector<8x16xf32>
    %1 = arith.truncf %0 : vector<8x16xf32> to vector<8x16xbf16>
    %c0_1 = arith.constant 0 : index
    %c0_2 = arith.constant 0 : index
    %2 = vector.load %arg2[%c0_1, %c0_2] : memref<16x128xbf16, #tpu.memory_space<vmem>>, vector<16x128xbf16>
    %cst = arith.constant dense<0.000000e+00> : vector<8x128xf32>
    %3 = tpu.matmul %1, %2, %cst {dimension_numbers = #tpu.dot_dimension_numbers<[1], [0], [0], [1], [0, 0, 1, 1], [], []>} : vector<8x16xbf16>, vector<16x128xbf16>, vector<8x128xf32> -> vector<8x128xf32>
    %c0_3 = arith.constant 0 : index
    %c0_4 = arith.constant 0 : index
    %4 = vector.load %arg3[%c0_3, %c0_4] : memref<1x128xf32, #tpu.memory_space<vmem>>, vector<1x128xf32>
    %5 = vector.broadcast %4 : vector<1x128xf32> to vector<8x128xf32>
    %6 = arith.addf %3, %5 : vector<8x128xf32>
    %cst_5 = arith.constant 0.000000e+00 : f32
    %7 = vector.broadcast %cst_5 : f32 to vector<8x128xf32>
    %8 = arith.cmpf ogt, %6, %7 : vector<8x128xf32>
    %cst_6 = arith.constant 0.00999999977 : f32
    %9 = vector.broadcast %cst_6 : f32 to vector<8x128xf32>
    %10 = arith.mulf %9, %6 : vector<8x128xf32>
    %11 = arith.select %8, %6, %10 : vector<8x128xi1>, vector<8x128xf32>
    %12 = arith.truncf %11 : vector<8x128xf32> to vector<8x128xbf16>
    %c0_7 = arith.constant 0 : index
    %c0_8 = arith.constant 0 : index
    %13 = vector.load %arg4[%c0_7, %c0_8] : memref<128x128xbf16, #tpu.memory_space<vmem>>, vector<128x128xbf16>
    %cst_9 = arith.constant dense<0.000000e+00> : vector<8x128xf32>
    %14 = tpu.matmul %12, %13, %cst_9 {dimension_numbers = #tpu.dot_dimension_numbers<[1], [0], [0], [1], [0, 0, 1, 1], [], []>} : vector<8x128xbf16>, vector<128x128xbf16>, vector<8x128xf32> -> vector<8x128xf32>
    %c0_10 = arith.constant 0 : index
    %c0_11 = arith.constant 0 : index
    %15 = vector.load %arg5[%c0_10, %c0_11] : memref<1x128xf32, #tpu.memory_space<vmem>>, vector<1x128xf32>
    %16 = vector.broadcast %15 : vector<1x128xf32> to vector<8x128xf32>
    %17 = arith.addf %14, %16 : vector<8x128xf32>
    %cst_12 = arith.constant 0.000000e+00 : f32
    %18 = vector.broadcast %cst_12 : f32 to vector<8x128xf32>
    %19 = arith.cmpf ogt, %17, %18 : vector<8x128xf32>
    %cst_13 = arith.constant 0.00999999977 : f32
    %20 = vector.broadcast %cst_13 : f32 to vector<8x128xf32>
    %21 = arith.mulf %20, %17 : vector<8x128xf32>
    %22 = arith.select %19, %17, %21 : vector<8x128xi1>, vector<8x128xf32>
    %23 = arith.truncf %22 : vector<8x128xf32> to vector<8x128xbf16>
    %c0_14 = arith.constant 0 : index
    %c0_15 = arith.constant 0 : index
    %24 = vector.load %arg6[%c0_14, %c0_15] : memref<128x128xbf16, #tpu.memory_space<vmem>>, vector<128x128xbf16>
    %cst_16 = arith.constant dense<0.000000e+00> : vector<8x128xf32>
    %25 = tpu.matmul %23, %24, %cst_16 {dimension_numbers = #tpu.dot_dimension_numbers<[1], [0], [0], [1], [0, 0, 1, 1], [], []>} : vector<8x128xbf16>, vector<128x128xbf16>, vector<8x128xf32> -> vector<8x128xf32>
    %c0_17 = arith.constant 0 : index
    %c0_18 = arith.constant 0 : index
    %26 = vector.load %arg7[%c0_17, %c0_18] : memref<1x128xf32, #tpu.memory_space<vmem>>, vector<1x128xf32>
    %27 = vector.broadcast %26 : vector<1x128xf32> to vector<8x128xf32>
    %28 = arith.addf %25, %27 : vector<8x128xf32>
    %29 = arith.truncf %28 : vector<8x128xf32> to vector<8x128xbf16>
    %c0_19 = arith.constant 0 : index
    %c0_20 = arith.constant 0 : index
    %30 = vector.load %arg8[%c0_19, %c0_20] : memref<8x128xbf16, #tpu.memory_space<vmem>>, vector<8x128xbf16>
    tpu.vector_store %arg8[%c0_19, %c0_20], %29 {strides = array<i32>} : memref<8x128xbf16, #tpu.memory_space<vmem>>, vector<8x128xbf16>,
    return
  }
  func.func @transform_0(%arg0: i32) -> (i32, i32) {
    %c0_i32 = arith.constant 0 : i32
    %c0_i32_0 = arith.constant 0 : i32
    return %arg0, %c0_i32 : i32, i32
  }
  func.func @transform_1(%arg0: i32) -> (i32, i32) {
    %c0_i32 = arith.constant 0 : i32
    %c0_i32_0 = arith.constant 0 : i32
    %c0_i32_1 = arith.constant 0 : i32
    return %c0_i32, %c0_i32_0 : i32, i32
  }
  func.func @transform_2(%arg0: i32) -> (i32, i32) {
    %c0_i32 = arith.constant 0 : i32
    %c0_i32_0 = arith.constant 0 : i32
    %c0_i32_1 = arith.constant 0 : i32
    return %c0_i32, %c0_i32_0 : i32, i32
  }
  func.func @transform_3(%arg0: i32) -> (i32, i32) {
    %c0_i32 = arith.constant 0 : i32
    %c0_i32_0 = arith.constant 0 : i32
    %c0_i32_1 = arith.constant 0 : i32
    return %c0_i32, %c0_i32_0 : i32, i32
  }
  func.func @transform_4(%arg0: i32) -> (i32, i32) {
    %c0_i32 = arith.constant 0 : i32
    %c0_i32_0 = arith.constant 0 : i32
    %c0_i32_1 = arith.constant 0 : i32
    return %c0_i32, %c0_i32_0 : i32, i32
  }
  func.func @transform_5(%arg0: i32) -> (i32, i32) {
    %c0_i32 = arith.constant 0 : i32
    %c0_i32_0 = arith.constant 0 : i32
    %c0_i32_1 = arith.constant 0 : i32
    return %c0_i32, %c0_i32_0 : i32, i32
  }
  func.func @transform_6(%arg0: i32) -> (i32, i32) {
    %c0_i32 = arith.constant 0 : i32
    %c0_i32_0 = arith.constant 0 : i32
    %c0_i32_1 = arith.constant 0 : i32
    return %c0_i32, %c0_i32_0 : i32, i32
  }
  func.func @transform_7(%arg0: i32) -> (i32, i32) {
    %c0_i32 = arith.constant 0 : i32
    %c0_i32_0 = arith.constant 0 : i32
    return %arg0, %c0_i32 : i32, i32
  }
}

module attributes {stable_mosaic.version = 11 : i64} {
  func.func @mlp_kernel(%arg0: i32, %arg1: memref<8x16xf32, #tpu.memory_space<vmem>>, %arg2: memref<16x128xbf16, #tpu.memory_space<vmem>>, %arg3: memref<1x128xf32, #tpu.memory_space<vmem>>, %arg4: memref<128x128xbf16, #tpu.memory_space<vmem>>, %arg5: memref<1x128xf32, #tpu.memory_space<vmem>>, %arg6: memref<128x128xbf16, #tpu.memory_space<vmem>>, %arg7: memref<1x128xf32, #tpu.memory_space<vmem>>, %arg8: memref<8x128xbf16, #tpu.memory_space<vmem>>) attributes {dimension_semantics = [#tpu.dimension_semantics<parallel>], iteration_bounds = array<i64: 1>, scalar_prefetch = 0 : i64, scratch_operands = 0 : i64, tpu.core_type = #tpu.core_type<tc>, window_params = [{transform_indices = @transform_0, window_bounds = array<i64: 8, 16>}, {pipeline_mode = #tpu.pipeline_mode<synchronous>, transform_indices = @transform_1, window_bounds = array<i64: 16, 128>}, {pipeline_mode = #tpu.pipeline_mode<synchronous>, transform_indices = @transform_2, window_bounds = array<i64: 1, 128>}, {pipeline_mode = #tpu.pipeline_mode<synchronous>, transform_indices = @transform_3, window_bounds = array<i64: 128, 128>}, {pipeline_mode = #tpu.pipeline_mode<synchronous>, transform_indices = @transform_4, window_bounds = array<i64: 1, 128>}, {pipeline_mode = #tpu.pipeline_mode<synchronous>, transform_indices = @transform_5, window_bounds = array<i64: 128, 128>}, {pipeline_mode = #tpu.pipeline_mode<synchronous>, transform_indices = @transform_6, window_bounds = array<i64: 1, 128>}, {transform_indices = @transform_7, window_bounds = array<i64: 8, 128>}]} {
    %c0 = arith.constant 0 : index
    %c0_0 = arith.constant 0 : index
    %0 = vector.load %arg1[%c0, %c0_0] : memref<8x16xf32, #tpu.memory_space<vmem>>, vector<8x16xf32>
    %1 = arith.truncf %0 : vector<8x16xf32> to vector<8x16xbf16>
    %c0_1 = arith.constant 0 : index
    %c0_2 = arith.constant 0 : index
    %2 = vector.load %arg2[%c0_1, %c0_2] : memref<16x128xbf16, #tpu.memory_space<vmem>>, vector<16x128xbf16>
    %cst = arith.constant dense<0.000000e+00> : vector<8x128xf32>
    %3 = tpu.matmul %1, %2, %cst {dimension_numbers = #tpu.dot_dimension_numbers<[1], [0], [0], [1], [0, 0, 1, 1], [], []>} : vector<8x16xbf16>, vector<16x128xbf16>, vector<8x128xf32> -> vector<8x128xf32>
    %c0_3 = arith.constant 0 : index
    %c0_4 = arith.constant 0 : index
    %4 = vector.load %arg3[%c0_3, %c0_4] : memref<1x128xf32, #tpu.memory_space<vmem>>, vector<1x128xf32>
    %5 = vector.broadcast %4 : vector<1x128xf32> to vector<8x128xf32>
    %6 = arith.addf %3, %5 : vector<8x128xf32>
    %cst_5 = arith.constant 0.000000e+00 : f32
    %7 = vector.broadcast %cst_5 : f32 to vector<8x128xf32>
    %8 = arith.cmpf ogt, %6, %7 : vector<8x128xf32>
    %cst_6 = arith.constant 0.00999999977 : f32
    %9 = vector.broadcast %cst_6 : f32 to vector<8x128xf32>
    %10 = arith.mulf %9, %6 : vector<8x128xf32>
    %11 = arith.select %8, %6, %10 : vector<8x128xi1>, vector<8x128xf32>
    %12 = arith.truncf %11 : vector<8x128xf32> to vector<8x128xbf16>
    %c0_7 = arith.constant 0 : index
    %c0_8 = arith.constant 0 : index
    %13 = vector.load %arg4[%c0_7, %c0_8] : memref<128x128xbf16, #tpu.memory_space<vmem>>, vector<128x128xbf16>
    %cst_9 = arith.constant dense<0.000000e+00> : vector<8x128xf32>
    %14 = tpu.matmul %12, %13, %cst_9 {dimension_numbers = #tpu.dot_dimension_numbers<[1], [0], [0], [1], [0, 0, 1, 1], [], []>} : vector<8x128xbf16>, vector<128x128xbf16>, vector<8x128xf32> -> vector<8x128xf32>
    %c0_10 = arith.constant 0 : index
    %c0_11 = arith.constant 0 : index
    %15 = vector.load %arg5[%c0_10, %c0_11] : memref<1x128xf32, #tpu.memory_space<vmem>>, vector<1x128xf32>
    %16 = vector.broadcast %15 : vector<1x128xf32> to vector<8x128xf32>
    %17 = arith.addf %14, %16 : vector<8x128xf32>
    %cst_12 = arith.constant 0.000000e+00 : f32
    %18 = vector.broadcast %cst_12 : f32 to vector<8x128xf32>
    %19 = arith.cmpf ogt, %17, %18 : vector<8x128xf32>
    %cst_13 = arith.constant 0.00999999977 : f32
    %20 = vector.broadcast %cst_13 : f32 to vector<8x128xf32>
    %21 = arith.mulf %20, %17 : vector<8x128xf32>
    %22 = arith.select %19, %17, %21 : vector<8x128xi1>, vector<8x128xf32>
    %23 = arith.truncf %22 : vector<8x128xf32> to vector<8x128xbf16>
    %c0_14 = arith.constant 0 : index
    %c0_15 = arith.constant 0 : index
    %24 = vector.load %arg6[%c0_14, %c0_15] : memref<128x128xbf16, #tpu.memory_space<vmem>>, vector<128x128xbf16>
    %cst_16 = arith.constant dense<0.000000e+00> : vector<8x128xf32>
    %25 = tpu.matmul %23, %24, %cst_16 {dimension_numbers = #tpu.dot_dimension_numbers<[1], [0], [0], [1], [0, 0, 1, 1], [], []>} : vector<8x128xbf16>, vector<128x128xbf16>, vector<8x128xf32> -> vector<8x128xf32>
    %c0_17 = arith.constant 0 : index
    %c0_18 = arith.constant 0 : index
    %26 = vector.load %arg7[%c0_17, %c0_18] : memref<1x128xf32, #tpu.memory_space<vmem>>, vector<1x128xf32>
    %27 = vector.broadcast %26 : vector<1x128xf32> to vector<8x128xf32>
    %28 = arith.addf %25, %27 : vector<8x128xf32>
    %29 = arith.truncf %28 : vector<8x128xf32> to vector<8x128xbf16>
    %c0_19 = arith.constant 0 : index
    %c0_20 = arith.constant 0 : index
    %30 = vector.load %arg8[%c0_19, %c0_20] : memref<8x128xbf16, #tpu.memory_space<vmem>>, vector<8x128xbf16>
    tpu.vector_store %arg8[%c0_19, %c0_20], %29 {strides = array<i32>} : memref<8x128xbf16, #tpu.memory_space<vmem>>, vector<8x128xbf16>,
    return
  }
  func.func @transform_0(%arg0: i32) -> (i32, i32) {
    %c0_i32 = arith.constant 0 : i32
    %c0_i32_0 = arith.constant 0 : i32
    return %arg0, %c0_i32 : i32, i32
  }
  func.func @transform_1(%arg0: i32) -> (i32, i32) {
    %c0_i32 = arith.constant 0 : i32
    %c0_i32_0 = arith.constant 0 : i32
    %c0_i32_1 = arith.constant 0 : i32
    return %c0_i32, %c0_i32_0 : i32, i32
  }
  func.func @transform_2(%arg0: i32) -> (i32, i32) {
    %c0_i32 = arith.constant 0 : i32
    %c0_i32_0 = arith.constant 0 : i32
    %c0_i32_1 = arith.constant 0 : i32
    return %c0_i32, %c0_i32_0 : i32, i32
  }
  func.func @transform_3(%arg0: i32) -> (i32, i32) {
    %c0_i32 = arith.constant 0 : i32
    %c0_i32_0 = arith.constant 0 : i32
    %c0_i32_1 = arith.constant 0 : i32
    return %c0_i32, %c0_i32_0 : i32, i32
  }
  func.func @transform_4(%arg0: i32) -> (i32, i32) {
    %c0_i32 = arith.constant 0 : i32
    %c0_i32_0 = arith.constant 0 : i32
    %c0_i32_1 = arith.constant 0 : i32
    return %c0_i32, %c0_i32_0 : i32, i32
  }
  func.func @transform_5(%arg0: i32) -> (i32, i32) {
    %c0_i32 = arith.constant 0 : i32
    %c0_i32_0 = arith.constant 0 : i32
    %c0_i32_1 = arith.constant 0 : i32
    return %c0_i32, %c0_i32_0 : i32, i32
  }
  func.func @transform_6(%arg0: i32) -> (i32, i32) {
    %c0_i32 = arith.constant 0 : i32
    %c0_i32_0 = arith.constant 0 : i32
    %c0_i32_1 = arith.constant 0 : i32
    return %c0_i32, %c0_i32_0 : i32, i32
  }
  func.func @transform_7(%arg0: i32) -> (i32, i32) {
    %c0_i32 = arith.constant 0 : i32
    %c0_i32_0 = arith.constant 0 : i32
    return %arg0, %c0_i32 : i32, i32
  }
}

</mosaic_0001>

<llo_original>
// kernel: tpu_custom_call.1
$region0: #{tpu_custom_call.1}
  #allocation0 [shape = 'u32[]', space=smem, size = 0x4, offset = 0x4, fixed_abs, tag = 'smem constant byte address 0x4 - core index']
  #allocation1 [shape = 'u32[144,128]{1,0:T(1,128)}', space=vmem, size = 0x12000, scoped, tag = 'internal scratch']
  %s0 = inlined_call_operand.hbm [shape: f32[8,16], index: 0, kind: input, shape index: {}]
  %s1 = inlined_call_operand.hbm [shape: bf16[16,128], index: 1, kind: input, shape index: {}]
  %s2 = inlined_call_operand.vmem [shape: f32[1,128], index: 2, kind: input, shape index: {}]
  %s3 = inlined_call_operand.hbm [shape: bf16[128,128], index: 3, kind: input, shape index: {}]
  %s4 = inlined_call_operand.vmem [shape: f32[1,128], index: 4, kind: input, shape index: {}]
  %s5 = inlined_call_operand.hbm [shape: bf16[128,128], index: 5, kind: input, shape index: {}]
  %s6 = inlined_call_operand.vmem [shape: f32[1,128], index: 6, kind: input, shape index: {}]
  %s7 = inlined_call_operand.hbm [shape: bf16[8,128], index: 7, kind: output, shape index: {}]
  %s8 = sld [smem:[#allocation0]]
  $region54: #{tpu_custom_call.1} parent=0
    _
  %s10 = ssub.s32 1, %s8
  %s11 = scalar_select 0, %s10, %s8
  $region1: #{tpu_custom_call.1} parent=0
    #allocation2 [shape = 'u8[4096]{0}', space=vmem, size = 0x1000, scoped, tag = 'input window, operand 0, single buffered']
    #allocation3 [shape = 's32[1]{0}', space=sflag, size = 0x4, scoped, tag = 'scoped memory for tpu_custom_call.1']
    #allocation4 [shape = 's32[1]{0}', space=sflag, size = 0x4, scoped, tag = 'scoped memory for tpu_custom_call.1']
    #allocation5 [shape = 'u8[4096]{0}', space=vmem, size = 0x1000, scoped, tag = 'input window, operand 1, single buffered']
    #allocation6 [shape = 's32[1]{0}', space=sflag, size = 0x4, scoped, tag = 'scoped memory for tpu_custom_call.1']
    #allocation7 [shape = 'u8[32768]{0}', space=vmem, size = 0x8000, scoped, tag = 'input window, operand 3, single buffered']
    #allocation8 [shape = 'u8[32768]{0}', space=vmem, size = 0x8000, scoped, tag = 'input window, operand 5, single buffered']
    #allocation9 [shape = 's32[1]{0}', space=sflag, size = 0x4, scoped, tag = 'scoped memory for tpu_custom_call.1']
    #allocation10 [shape = 'u8[2048]{0}', space=vmem, size = 0x800, scoped, tag = 'output window, operand 0, single buffered']
    %12 = vsyncpa [#allocation3], 0
    %13 = vsyncpa [#allocation6], 0
    %14 = vsyncpa [#allocation9], 0
    %15 = vsyncpa [#allocation4], 0
    // Predicated region
    $region2: #{tpu_custom_call.1} parent=1 // pred_check
      _
    $region3: #{tpu_custom_call.1} parent=1 // pred_check_branch
      %17 = sbr.rel (0) target = $region5
    $region4: #{tpu_custom_call.1} parent=1 // pred_region
      %s19 = ssub.s32 128, 128
      %20 = vsyncadd [#allocation3], %s19
      %s22 = sshll.u32 [#allocation2], 4
      %s23 = int_to_ptr.vmem [resolvable:$true] %s22
      %25 = dma.hbm_to_vmem [thread:$0]  %s0, 128, %s23, [#allocation3]
    $region5: #{tpu_custom_call.1} parent=1 // pred_fallthru
      _
    // Predicated region
    $region6: #{tpu_custom_call.1} parent=1 // pred_check
      _
    $region7: #{tpu_custom_call.1} parent=1 // pred_check_branch
      %27 = sbr.rel (0) target = $region9
    $region8: #{tpu_custom_call.1} parent=1 // pred_region
      %s29 = ssub.s32 128, 128
      %30 = vsyncadd [#allocation6], %s29
      %s31 = sshll.u32 [#allocation5], 4
      %s32 = int_to_ptr.vmem [resolvable:$true] %s31
      %37 = dma.hbm_to_vmem [thread:$0]  %s1, 128, %s32, [#allocation6], 64, 64, 4
    $region9: #{tpu_custom_call.1} parent=1 // pred_fallthru
      _
    // Predicated region
    $region10: #{tpu_custom_call.1} parent=1 // pred_check
      _
    $region11: #{tpu_custom_call.1} parent=1 // pred_check_branch
      %39 = sbr.rel (0) target = $region13
    $region12: #{tpu_custom_call.1} parent=1 // pred_region
      _
    $region13: #{tpu_custom_call.1} parent=1 // pred_fallthru
      _
    // Predicated region
    $region14: #{tpu_custom_call.1} parent=1 // pred_check
      _
    $region15: #{tpu_custom_call.1} parent=1 // pred_check_branch
      %41 = sbr.rel (0) target = $region17
    $region16: #{tpu_custom_call.1} parent=1 // pred_region
      %s43 = ssub.s32 1024, 1024
      %44 = vsyncadd [#allocation6], %s43
      %s45 = sshll.u32 [#allocation7], 4
      %s46 = int_to_ptr.vmem [resolvable:$true] %s45
      %51 = dma.hbm_to_vmem [thread:$0]  %s3, 1024, %s46, [#allocation6], 64, 64, 4
    $region17: #{tpu_custom_call.1} parent=1 // pred_fallthru
      _
    // Predicated region
    $region18: #{tpu_custom_call.1} parent=1 // pred_check
      _
    $region19: #{tpu_custom_call.1} parent=1 // pred_check_branch
      %53 = sbr.rel (0) target = $region21
    $region20: #{tpu_custom_call.1} parent=1 // pred_region
      _
    $region21: #{tpu_custom_call.1} parent=1 // pred_fallthru
      _
    // Predicated region
    $region22: #{tpu_custom_call.1} parent=1 // pred_check
      _
    $region23: #{tpu_custom_call.1} parent=1 // pred_check_branch
      %55 = sbr.rel (0) target = $region25
    $region24: #{tpu_custom_call.1} parent=1 // pred_region
      %s57 = ssub.s32 1024, 1024
      %58 = vsyncadd [#allocation9], %s57
      %s59 = sshll.u32 [#allocation8], 4
      %s60 = int_to_ptr.vmem [resolvable:$true] %s59
      %65 = dma.hbm_to_vmem [thread:$0]  %s5, 1024, %s60, [#allocation9], 64, 64, 4
    $region25: #{tpu_custom_call.1} parent=1 // pred_fallthru
      _
    // Predicated region
    $region26: #{tpu_custom_call.1} parent=1 // pred_check
      _
    $region27: #{tpu_custom_call.1} parent=1 // pred_check_branch
      %67 = sbr.rel (0) target = $region29
    $region28: #{tpu_custom_call.1} parent=1 // pred_region
      _
    $region29: #{tpu_custom_call.1} parent=1 // pred_fallthru
      _
    // Predicated region
    $region30: #{tpu_custom_call.1} parent=1 // pred_check
      _
    $region31: #{tpu_custom_call.1} parent=1 // pred_check_branch
      %69 = sbr.rel (0) target = $region33
    $region32: #{tpu_custom_call.1} parent=1 // pred_region
      %70 = dma.done [#allocation3], 128
    $region33: #{tpu_custom_call.1} parent=1 // pred_fallthru
      _
    // Predicated region
    $region34: #{tpu_custom_call.1} parent=1 // pred_check
      _
    $region35: #{tpu_custom_call.1} parent=1 // pred_check_branch
      %72 = sbr.rel (0) target = $region37
    $region36: #{tpu_custom_call.1} parent=1 // pred_region
      %73 = dma.done [#allocation6], 128
    $region37: #{tpu_custom_call.1} parent=1 // pred_fallthru
      _
    // Predicated region
    $region38: #{tpu_custom_call.1} parent=1 // pred_check
      _
    $region39: #{tpu_custom_call.1} parent=1 // pred_check_branch
      %75 = sbr.rel (0) target = $region41
    $region40: #{tpu_custom_call.1} parent=1 // pred_region
      %76 = dma.done [#allocation6], 1024
    $region41: #{tpu_custom_call.1} parent=1 // pred_fallthru
      _
    // Predicated region
    $region42: #{tpu_custom_call.1} parent=1 // pred_check
      _
    $region43: #{tpu_custom_call.1} parent=1 // pred_check_branch
      %78 = sbr.rel (0) target = $region45
    $region44: #{tpu_custom_call.1} parent=1 // pred_region
      %79 = dma.done [#allocation9], 1024
    $region45: #{tpu_custom_call.1} parent=1 // pred_fallthru
      _
    %v81 = vld [vmem:[#allocation2] sm:$0xff]
    %v82 = vpack.c.bf16 %v81, %v81
    %v83 = vld [vmem:[#allocation5] sm:$0xf]
    %v84 = vld [vmem:[#allocation5 + $0x4] sm:$0xf]
    %v85 = vld [vmem:[%s2] sm:$0x1]
    %v87 = vlaneseq
    %v88 = vshrl.u32 %v87, 7
    %v89 = vsub.s32 0, %v88
    %v90 = vrot.slane %v85, %v89
    %v94 = vunpack.c.l.b16 %v83
    %v95 = vunpack.c.l.b16 %v84
    %v96 = vpack.c.b16 %v95, %v94
    %vm98 = vcmask 130048
    %v100 = vsel %vm98, %v82, 0
    %102 = vmatprep.subr.bf16.mxu0 0
    %103 = vmatpush1.bf16.msra.mxu0 0
    %104 = vmatprep.subr.bf16.mxu0 0
    %105 = vmatpush1.bf16.msra.mxu0 0
    %106 = vmatprep.subr.bf16.mxu0 0
    %107 = vmatpush1.bf16.msra.mxu0 0
    %108 = vmatprep.subr.bf16.mxu0 0
    %109 = vmatpush1.bf16.msra.mxu0 0
    %110 = vmatprep.subr.bf16.mxu0 0
    %111 = vmatpush1.bf16.msra.mxu0 0
    %112 = vmatprep.subr.bf16.mxu0 0
    %113 = vmatpush1.bf16.msra.mxu0 0
    %114 = vmatprep.subr.bf16.mxu0 0
    %115 = vmatpush1.bf16.msra.mxu0 0
    %116 = vmatprep.subr.bf16.mxu0 0
    %117 = vmatpush1.bf16.msra.mxu0 %v96
    %118 = vmatprep.subr.bf16.mxu0 0
    %119 = vmatpush2.bf16.msra.mxu0 0
    %120 = vmatprep.subr.bf16.mxu0 0
    %121 = vmatpush2.bf16.msra.mxu0 0
    %122 = vmatprep.subr.bf16.mxu0 0
    %123 = vmatpush2.bf16.msra.mxu0 0
    %124 = vmatprep.subr.bf16.mxu0 0
    %125 = vmatpush2.bf16.msra.mxu0 0
    %126 = vmatprep.subr.bf16.mxu0 0
    %127 = vmatpush2.bf16.msra.mxu0 0
    %128 = vmatprep.subr.bf16.mxu0 0
    %129 = vmatpush2.bf16.msra.mxu0 0
    %130 = vmatprep.subr.bf16.mxu0 0
    %131 = vmatpush2.bf16.msra.mxu0 0
    %132 = vmatprep.subr.bf16.mxu0 0
    %133 = vmatpush2.bf16.msra.mxu0 0
    %134 = vmatprep.mubr.bf16.mxu0 0
    %135 = vmatmul.mubr.bf16.gmra.mxu0 %v100
    %v136 = vpop.f32.mrf.mxu0
    %v137 = vadd.f32 %v90, %v136
    %v138 = vpop.f32.mrf.mxu0
    %v139 = vpop.f32.mrf.mxu0
    %v140 = vpop.f32.mrf.mxu0
    %141 = vdwg.mxu0
    %vm142 = vcmp.gt.f32.partialorder %v137, 0.0
    %v143 = vmul.f32 %v137, 0.01
    %v144 = vsel %vm142, %v137, %v143
    %v145 = vpack.c.bf16 %v144, %v144
    %v146 = vld [vmem:[#allocation7] sm:$0xf]
    %v147 = vld [vmem:[#allocation7 + $0x4] sm:$0xf]
    %v148 = vld [vmem:[#allocation7 + $0x8] sm:$0xf]
    %v149 = vld [vmem:[#allocation7 + $0xc] sm:$0xf]
    %v150 = vld [vmem:[#allocation7 + $0x10] sm:$0xf]
    %v151 = vld [vmem:[#allocation7 + $0x14] sm:$0xf]
    %v152 = vld [vmem:[#allocation7 + $0x18] sm:$0xf]
    %v153 = vld [vmem:[#allocation7 + $0x1c] sm:$0xf]
    %v154 = vld [vmem:[#allocation7 + $0x20] sm:$0xf]
    %v155 = vld [vmem:[#allocation7 + $0x24] sm:$0xf]
    %v156 = vld [vmem:[#allocation7 + $0x28] sm:$0xf]
    %v157 = vld [vmem:[#allocation7 + $0x2c] sm:$0xf]
    %v158 = vld [vmem:[#allocation7 + $0x30] sm:$0xf]
    %v159 = vld [vmem:[#allocation7 + $0x34] sm:$0xf]
    %v160 = vld [vmem:[#allocation7 + $0x38] sm:$0xf]
    %v161 = vld [vmem:[#allocation7 + $0x3c] sm:$0xf]
    %v162 = vld [vmem:[%s4] sm:$0x1]
    %v164 = vlaneseq
    %v165 = vshrl.u32 %v164, 7
    %v166 = vsub.s32 0, %v165
    %v167 = vrot.slane %v162, %v166
    %v185 = vunpack.c.l.b16 %v146
    %v186 = vunpack.c.l.b16 %v147
    %v187 = vunpack.c.l.b16 %v148
    %v188 = vunpack.c.l.b16 %v149
    %v189 = vunpack.c.l.b16 %v150
    %v190 = vunpack.c.l.b16 %v151
    %v191 = vunpack.c.l.b16 %v152
    %v192 = vunpack.c.l.b16 %v153
    %v193 = vunpack.c.l.b16 %v154
    %v194 = vunpack.c.l.b16 %v155
    %v195 = vunpack.c.l.b16 %v156
    %v196 = vunpack.c.l.b16 %v157
    %v197 = vunpack.c.l.b16 %v158
    %v198 = vunpack.c.l.b16 %v159
    %v199 = vunpack.c.l.b16 %v160
    %v200 = vunpack.c.l.b16 %v161
    %v201 = vpack.c.b16 %v186, %v185
    %v202 = vpack.c.b16 %v188, %v187
    %v203 = vpack.c.b16 %v190, %v189
    %v204 = vpack.c.b16 %v192, %v191
    %v205 = vpack.c.b16 %v194, %v193
    %v206 = vpack.c.b16 %v196, %v195
    %v207 = vpack.c.b16 %v198, %v197
    %v208 = vpack.c.b16 %v200, %v199
    %217 = vmatprep.subr.bf16.mxu0 0
    %218 = vmatpush1.bf16.msra.mxu0 %v208
    %219 = vmatprep.subr.bf16.mxu0 0
    %220 = vmatpush1.bf16.msra.mxu0 %v207
    %221 = vmatprep.subr.bf16.mxu0 0
    %222 = vmatpush1.bf16.msra.mxu0 %v206
    %223 = vmatprep.subr.bf16.mxu0 0
    %224 = vmatpush1.bf16.msra.mxu0 %v205
    %225 = vmatprep.subr.bf16.mxu0 0
    %226 = vmatpush1.bf16.msra.mxu0 %v204
    %227 = vmatprep.subr.bf16.mxu0 0
    %228 = vmatpush1.bf16.msra.mxu0 %v203
    %229 = vmatprep.subr.bf16.mxu0 0
    %230 = vmatpush1.bf16.msra.mxu0 %v202
    %231 = vmatprep.subr.bf16.mxu0 0
    %232 = vmatpush1.bf16.msra.mxu0 %v201
    %233 = vmatprep.subr.bf16.mxu0 0
    %234 = vmatpush2.bf16.msra.mxu0 0
    %235 = vmatprep.subr.bf16.mxu0 0
    %236 = vmatpush2.bf16.msra.mxu0 0
    %237 = vmatprep.subr.bf16.mxu0 0
    %238 = vmatpush2.bf16.msra.mxu0 0
    %239 = vmatprep.subr.bf16.mxu0 0
    %240 = vmatpush2.bf16.msra.mxu0 0
    %241 = vmatprep.subr.bf16.mxu0 0
    %242 = vmatpush2.bf16.msra.mxu0 0
    %243 = vmatprep.subr.bf16.mxu0 0
    %244 = vmatpush2.bf16.msra.mxu0 0
    %245 = vmatprep.subr.bf16.mxu0 0
    %246 = vmatpush2.bf16.msra.mxu0 0
    %247 = vmatprep.subr.bf16.mxu0 0
    %248 = vmatpush2.bf16.msra.mxu0 0
    %249 = vmatprep.mubr.bf16.mxu0 0
    %250 = vmatmul.mubr.bf16.gmra.mxu0 %v145
    %v251 = vpop.f32.mrf.mxu0
    %v252 = vadd.f32 %v167, %v251
    %v253 = vpop.f32.mrf.mxu0
    %v254 = vpop.f32.mrf.mxu0
    %v255 = vpop.f32.mrf.mxu0
    %256 = vdwg.mxu0
    %vm257 = vcmp.gt.f32.partialorder %v252, 0.0
    %v258 = vmul.f32 %v252, 0.01
    %v259 = vsel %vm257, %v252, %v258
    %v260 = vpack.c.bf16 %v259, %v259
    %v261 = vld [vmem:[#allocation8] sm:$0xf]
    %v262 = vld [vmem:[#allocation8 + $0x4] sm:$0xf]
    %v263 = vld [vmem:[#allocation8 + $0x8] sm:$0xf]
    %v264 = vld [vmem:[#allocation8 + $0xc] sm:$0xf]
    %v265 = vld [vmem:[#allocation8 + $0x10] sm:$0xf]
    %v266 = vld [vmem:[#allocation8 + $0x14] sm:$0xf]
    %v267 = vld [vmem:[#allocation8 + $0x18] sm:$0xf]
    %v268 = vld [vmem:[#allocation8 + $0x1c] sm:$0xf]
    %v269 = vld [vmem:[#allocation8 + $0x20] sm:$0xf]
    %v270 = vld [vmem:[#allocation8 + $0x24] sm:$0xf]
    %v271 = vld [vmem:[#allocation8 + $0x28] sm:$0xf]
    %v272 = vld [vmem:[#allocation8 + $0x2c] sm:$0xf]
    %v273 = vld [vmem:[#allocation8 + $0x30] sm:$0xf]
    %v274 = vld [vmem:[#allocation8 + $0x34] sm:$0xf]
    %v275 = vld [vmem:[#allocation8 + $0x38] sm:$0xf]
    %v276 = vld [vmem:[#allocation8 + $0x3c] sm:$0xf]
    %v277 = vld [vmem:[%s6] sm:$0x1]
    %v279 = vlaneseq
    %v280 = vshrl.u32 %v279, 7
    %v281 = vsub.s32 0, %v280
    %v282 = vrot.slane %v277, %v281
    %v300 = vunpack.c.l.b16 %v261
    %v301 = vunpack.c.l.b16 %v262
    %v302 = vunpack.c.l.b16 %v263
    %v303 = vunpack.c.l.b16 %v264
    %v304 = vunpack.c.l.b16 %v265
    %v305 = vunpack.c.l.b16 %v266
    %v306 = vunpack.c.l.b16 %v267
    %v307 = vunpack.c.l.b16 %v268
    %v308 = vunpack.c.l.b16 %v269
    %v309 = vunpack.c.l.b16 %v270
    %v310 = vunpack.c.l.b16 %v271
    %v311 = vunpack.c.l.b16 %v272
    %v312 = vunpack.c.l.b16 %v273
    %v313 = vunpack.c.l.b16 %v274
    %v314 = vunpack.c.l.b16 %v275
    %v315 = vunpack.c.l.b16 %v276
    %v316 = vpack.c.b16 %v301, %v300
    %v317 = vpack.c.b16 %v303, %v302
    %v318 = vpack.c.b16 %v305, %v304
    %v319 = vpack.c.b16 %v307, %v306
    %v320 = vpack.c.b16 %v309, %v308
    %v321 = vpack.c.b16 %v311, %v310
    %v322 = vpack.c.b16 %v313, %v312
    %v323 = vpack.c.b16 %v315, %v314
    %332 = vmatprep.subr.bf16.mxu0 0
    %333 = vmatpush1.bf16.msra.mxu0 %v323
    %334 = vmatprep.subr.bf16.mxu0 0
    %335 = vmatpush1.bf16.msra.mxu0 %v322
    %336 = vmatprep.subr.bf16.mxu0 0
    %337 = vmatpush1.bf16.msra.mxu0 %v321
    %338 = vmatprep.subr.bf16.mxu0 0
    %339 = vmatpush1.bf16.msra.mxu0 %v320
    %340 = vmatprep.subr.bf16.mxu0 0
    %341 = vmatpush1.bf16.msra.mxu0 %v319
    %342 = vmatprep.subr.bf16.mxu0 0
    %343 = vmatpush1.bf16.msra.mxu0 %v318
    %344 = vmatprep.subr.bf16.mxu0 0
    %345 = vmatpush1.bf16.msra.mxu0 %v317
    %346 = vmatprep.subr.bf16.mxu0 0
    %347 = vmatpush1.bf16.msra.mxu0 %v316
    %348 = vmatprep.subr.bf16.mxu0 0
    %349 = vmatpush2.bf16.msra.mxu0 0
    %350 = vmatprep.subr.bf16.mxu0 0
    %351 = vmatpush2.bf16.msra.mxu0 0
    %352 = vmatprep.subr.bf16.mxu0 0
    %353 = vmatpush2.bf16.msra.mxu0 0
    %354 = vmatprep.subr.bf16.mxu0 0
    %355 = vmatpush2.bf16.msra.mxu0 0
    %356 = vmatprep.subr.bf16.mxu0 0
    %357 = vmatpush2.bf16.msra.mxu0 0
    %358 = vmatprep.subr.bf16.mxu0 0
    %359 = vmatpush2.bf16.msra.mxu0 0
    %360 = vmatprep.subr.bf16.mxu0 0
    %361 = vmatpush2.bf16.msra.mxu0 0
    %362 = vmatprep.subr.bf16.mxu0 0
    %363 = vmatpush2.bf16.msra.mxu0 0
    %364 = vmatprep.mubr.bf16.mxu0 0
    %365 = vmatmul.mubr.bf16.gmra.mxu0 %v260
    %v366 = vpop.f32.mrf.mxu0
    %v367 = vadd.f32 %v282, %v366
    %v368 = vpop.f32.mrf.mxu0
    %v369 = vpop.f32.mrf.mxu0
    %v370 = vpop.f32.mrf.mxu0
    %371 = vdwg.mxu0
    %v372 = vpack.c.bf16 %v367, %v367
    %373 = vst [vmem:[#allocation10] sm:$0xf] %v372
    // Predicated region
    $region46: #{tpu_custom_call.1} parent=1 // pred_check
      _
    $region47: #{tpu_custom_call.1} parent=1 // pred_check_branch
      %375 = sbr.rel (0) target = $region49
    $region48: #{tpu_custom_call.1} parent=1 // pred_region
      %s377 = ssub.s32 64, 64
      %378 = vsyncadd [#allocation4], %s377
      %s380 = sshll.u32 [#allocation10], 4
      %s381 = int_to_ptr.vmem [resolvable:$true] %s380
      %383 = dma.vmem_to_hbm [thread:$0]  %s381, 64, %s7, [#allocation4]
    $region49: #{tpu_custom_call.1} parent=1 // pred_fallthru
      _
    // Predicated region
    $region50: #{tpu_custom_call.1} parent=1 // pred_check
      _
    $region51: #{tpu_custom_call.1} parent=1 // pred_check_branch
      %385 = sbr.rel (0) target = $region53
    $region52: #{tpu_custom_call.1} parent=1 // pred_region
      %386 = dma.done [#allocation4], 64
    $region53: #{tpu_custom_call.1} parent=1 // pred_fallthru
      _
    %387 = vsyncpa [#allocation3], 1
    %388 = vsyncpa [#allocation6], 1
    %389 = vsyncpa [#allocation9], 1
    %390 = vsyncpa [#allocation4], 1

// kernel: tpu_custom_call.1
$region0: #{tpu_custom_call.1}
  #allocation0 [shape = 'u32[]', space=smem, size = 0x4, offset = 0x4, fixed_abs, tag = 'smem constant byte address 0x4 - core index']
  #allocation1 [shape = 'u32[144,128]{1,0:T(1,128)}', space=vmem, size = 0x12000, scoped, tag = 'internal scratch']
  %s0 = inlined_call_operand.hbm [shape: f32[8,16], index: 0, kind: input, shape index: {}]
  %s1 = inlined_call_operand.hbm [shape: bf16[16,128], index: 1, kind: input, shape index: {}]
  %s2 = inlined_call_operand.vmem [shape: f32[1,128], index: 2, kind: input, shape index: {}]
  %s3 = inlined_call_operand.hbm [shape: bf16[128,128], index: 3, kind: input, shape index: {}]
  %s4 = inlined_call_operand.vmem [shape: f32[1,128], index: 4, kind: input, shape index: {}]
  %s5 = inlined_call_operand.hbm [shape: bf16[128,128], index: 5, kind: input, shape index: {}]
  %s6 = inlined_call_operand.vmem [shape: f32[1,128], index: 6, kind: input, shape index: {}]
  %s7 = inlined_call_operand.hbm [shape: bf16[8,128], index: 7, kind: output, shape index: {}]
  %s8 = sld [smem:[#allocation0]]
  $region54: #{tpu_custom_call.1} parent=0
    _
  %s10 = ssub.s32 1, %s8
  %s11 = scalar_select 0, %s10, %s8
  $region1: #{tpu_custom_call.1} parent=0
    #allocation2 [shape = 'u8[4096]{0}', space=vmem, size = 0x1000, scoped, tag = 'input window, operand 0, single buffered']
    #allocation3 [shape = 's32[1]{0}', space=sflag, size = 0x4, scoped, tag = 'scoped memory for tpu_custom_call.1']
    #allocation4 [shape = 's32[1]{0}', space=sflag, size = 0x4, scoped, tag = 'scoped memory for tpu_custom_call.1']
    #allocation5 [shape = 'u8[4096]{0}', space=vmem, size = 0x1000, scoped, tag = 'input window, operand 1, single buffered']
    #allocation6 [shape = 's32[1]{0}', space=sflag, size = 0x4, scoped, tag = 'scoped memory for tpu_custom_call.1']
    #allocation7 [shape = 'u8[32768]{0}', space=vmem, size = 0x8000, scoped, tag = 'input window, operand 3, single buffered']
    #allocation8 [shape = 'u8[32768]{0}', space=vmem, size = 0x8000, scoped, tag = 'input window, operand 5, single buffered']
    #allocation9 [shape = 's32[1]{0}', space=sflag, size = 0x4, scoped, tag = 'scoped memory for tpu_custom_call.1']
    #allocation10 [shape = 'u8[2048]{0}', space=vmem, size = 0x800, scoped, tag = 'output window, operand 0, single buffered']
    %12 = vsyncpa [#allocation3], 0
    %13 = vsyncpa [#allocation6], 0
    %14 = vsyncpa [#allocation9], 0
    %15 = vsyncpa [#allocation4], 0
    // Predicated region
    $region2: #{tpu_custom_call.1} parent=1 // pred_check
      _
    $region3: #{tpu_custom_call.1} parent=1 // pred_check_branch
      %17 = sbr.rel (0) target = $region5
    $region4: #{tpu_custom_call.1} parent=1 // pred_region
      %s19 = ssub.s32 128, 128
      %20 = vsyncadd [#allocation3], %s19
      %s22 = sshll.u32 [#allocation2], 4
      %s23 = int_to_ptr.vmem [resolvable:$true] %s22
      %25 = dma.hbm_to_vmem [thread:$0]  %s0, 128, %s23, [#allocation3]
    $region5: #{tpu_custom_call.1} parent=1 // pred_fallthru
      _
    // Predicated region
    $region6: #{tpu_custom_call.1} parent=1 // pred_check
      _
    $region7: #{tpu_custom_call.1} parent=1 // pred_check_branch
      %27 = sbr.rel (0) target = $region9
    $region8: #{tpu_custom_call.1} parent=1 // pred_region
      %s29 = ssub.s32 128, 128
      %30 = vsyncadd [#allocation6], %s29
      %s31 = sshll.u32 [#allocation5], 4
      %s32 = int_to_ptr.vmem [resolvable:$true] %s31
      %37 = dma.hbm_to_vmem [thread:$0]  %s1, 128, %s32, [#allocation6], 64, 64, 4
    $region9: #{tpu_custom_call.1} parent=1 // pred_fallthru
      _
    // Predicated region
    $region10: #{tpu_custom_call.1} parent=1 // pred_check
      _
    $region11: #{tpu_custom_call.1} parent=1 // pred_check_branch
      %39 = sbr.rel (0) target = $region13
    $region12: #{tpu_custom_call.1} parent=1 // pred_region
      _
    $region13: #{tpu_custom_call.1} parent=1 // pred_fallthru
      _
    // Predicated region
    $region14: #{tpu_custom_call.1} parent=1 // pred_check
      _
    $region15: #{tpu_custom_call.1} parent=1 // pred_check_branch
      %41 = sbr.rel (0) target = $region17
    $region16: #{tpu_custom_call.1} parent=1 // pred_region
      %s43 = ssub.s32 1024, 1024
      %44 = vsyncadd [#allocation6], %s43
      %s45 = sshll.u32 [#allocation7], 4
      %s46 = int_to_ptr.vmem [resolvable:$true] %s45
      %51 = dma.hbm_to_vmem [thread:$0]  %s3, 1024, %s46, [#allocation6], 64, 64, 4
    $region17: #{tpu_custom_call.1} parent=1 // pred_fallthru
      _
    // Predicated region
    $region18: #{tpu_custom_call.1} parent=1 // pred_check
      _
    $region19: #{tpu_custom_call.1} parent=1 // pred_check_branch
      %53 = sbr.rel (0) target = $region21
    $region20: #{tpu_custom_call.1} parent=1 // pred_region
      _
    $region21: #{tpu_custom_call.1} parent=1 // pred_fallthru
      _
    // Predicated region
    $region22: #{tpu_custom_call.1} parent=1 // pred_check
      _
    $region23: #{tpu_custom_call.1} parent=1 // pred_check_branch
      %55 = sbr.rel (0) target = $region25
    $region24: #{tpu_custom_call.1} parent=1 // pred_region
      %s57 = ssub.s32 1024, 1024
      %58 = vsyncadd [#allocation9], %s57
      %s59 = sshll.u32 [#allocation8], 4
      %s60 = int_to_ptr.vmem [resolvable:$true] %s59
      %65 = dma.hbm_to_vmem [thread:$0]  %s5, 1024, %s60, [#allocation9], 64, 64, 4
    $region25: #{tpu_custom_call.1} parent=1 // pred_fallthru
      _
    // Predicated region
    $region26: #{tpu_custom_call.1} parent=1 // pred_check
      _
    $region27: #{tpu_custom_call.1} parent=1 // pred_check_branch
      %67 = sbr.rel (0) target = $region29
    $region28: #{tpu_custom_call.1} parent=1 // pred_region
      _
    $region29: #{tpu_custom_call.1} parent=1 // pred_fallthru
      _
    // Predicated region
    $region30: #{tpu_custom_call.1} parent=1 // pred_check
      _
    $region31: #{tpu_custom_call.1} parent=1 // pred_check_branch
      %69 = sbr.rel (0) target = $region33
    $region32: #{tpu_custom_call.1} parent=1 // pred_region
      %70 = dma.done [#allocation3], 128
    $region33: #{tpu_custom_call.1} parent=1 // pred_fallthru
      _
    // Predicated region
    $region34: #{tpu_custom_call.1} parent=1 // pred_check
      _
    $region35: #{tpu_custom_call.1} parent=1 // pred_check_branch
      %72 = sbr.rel (0) target = $region37
    $region36: #{tpu_custom_call.1} parent=1 // pred_region
      %73 = dma.done [#allocation6], 128
    $region37: #{tpu_custom_call.1} parent=1 // pred_fallthru
      _
    // Predicated region
    $region38: #{tpu_custom_call.1} parent=1 // pred_check
      _
    $region39: #{tpu_custom_call.1} parent=1 // pred_check_branch
      %75 = sbr.rel (0) target = $region41
    $region40: #{tpu_custom_call.1} parent=1 // pred_region
      %76 = dma.done [#allocation6], 1024
    $region41: #{tpu_custom_call.1} parent=1 // pred_fallthru
      _
    // Predicated region
    $region42: #{tpu_custom_call.1} parent=1 // pred_check
      _
    $region43: #{tpu_custom_call.1} parent=1 // pred_check_branch
      %78 = sbr.rel (0) target = $region45
    $region44: #{tpu_custom_call.1} parent=1 // pred_region
      %79 = dma.done [#allocation9], 1024
    $region45: #{tpu_custom_call.1} parent=1 // pred_fallthru
      _
    %v81 = vld [vmem:[#allocation2] sm:$0xff]
    %v82 = vpack.c.bf16 %v81, %v81
    %v83 = vld [vmem:[#allocation5] sm:$0xf]
    %v84 = vld [vmem:[#allocation5 + $0x4] sm:$0xf]
    %v85 = vld [vmem:[%s2] sm:$0x1]
    %v87 = vlaneseq
    %v88 = vshrl.u32 %v87, 7
    %v89 = vsub.s32 0, %v88
    %v90 = vrot.slane %v85, %v89
    %v94 = vunpack.c.l.b16 %v83
    %v95 = vunpack.c.l.b16 %v84
    %v96 = vpack.c.b16 %v95, %v94
    %vm98 = vcmask 130048
    %v100 = vsel %vm98, %v82, 0
    %102 = vmatprep.subr.bf16.mxu0 0
    %103 = vmatpush1.bf16.msra.mxu0 0
    %104 = vmatprep.subr.bf16.mxu0 0
    %105 = vmatpush1.bf16.msra.mxu0 0
    %106 = vmatprep.subr.bf16.mxu0 0
    %107 = vmatpush1.bf16.msra.mxu0 0
    %108 = vmatprep.subr.bf16.mxu0 0
    %109 = vmatpush1.bf16.msra.mxu0 0
    %110 = vmatprep.subr.bf16.mxu0 0
    %111 = vmatpush1.bf16.msra.mxu0 0
    %112 = vmatprep.subr.bf16.mxu0 0
    %113 = vmatpush1.bf16.msra.mxu0 0
    %114 = vmatprep.subr.bf16.mxu0 0
    %115 = vmatpush1.bf16.msra.mxu0 0
    %116 = vmatprep.subr.bf16.mxu0 0
    %117 = vmatpush1.bf16.msra.mxu0 %v96
    %118 = vmatprep.subr.bf16.mxu0 0
    %119 = vmatpush2.bf16.msra.mxu0 0
    %120 = vmatprep.subr.bf16.mxu0 0
    %121 = vmatpush2.bf16.msra.mxu0 0
    %122 = vmatprep.subr.bf16.mxu0 0
    %123 = vmatpush2.bf16.msra.mxu0 0
    %124 = vmatprep.subr.bf16.mxu0 0
    %125 = vmatpush2.bf16.msra.mxu0 0
    %126 = vmatprep.subr.bf16.mxu0 0
    %127 = vmatpush2.bf16.msra.mxu0 0
    %128 = vmatprep.subr.bf16.mxu0 0
    %129 = vmatpush2.bf16.msra.mxu0 0
    %130 = vmatprep.subr.bf16.mxu0 0
    %131 = vmatpush2.bf16.msra.mxu0 0
    %132 = vmatprep.subr.bf16.mxu0 0
    %133 = vmatpush2.bf16.msra.mxu0 0
    %134 = vmatprep.mubr.bf16.mxu0 0
    %135 = vmatmul.mubr.bf16.gmra.mxu0 %v100
    %v136 = vpop.f32.mrf.mxu0
    %v137 = vadd.f32 %v90, %v136
    %v138 = vpop.f32.mrf.mxu0
    %v139 = vpop.f32.mrf.mxu0
    %v140 = vpop.f32.mrf.mxu0
    %141 = vdwg.mxu0
    %vm142 = vcmp.gt.f32.partialorder %v137, 0.0
    %v143 = vmul.f32 %v137, 0.01
    %v144 = vsel %vm142, %v137, %v143
    %v145 = vpack.c.bf16 %v144, %v144
    %v146 = vld [vmem:[#allocation7] sm:$0xf]
    %v147 = vld [vmem:[#allocation7 + $0x4] sm:$0xf]
    %v148 = vld [vmem:[#allocation7 + $0x8] sm:$0xf]
    %v149 = vld [vmem:[#allocation7 + $0xc] sm:$0xf]
    %v150 = vld [vmem:[#allocation7 + $0x10] sm:$0xf]
    %v151 = vld [vmem:[#allocation7 + $0x14] sm:$0xf]
    %v152 = vld [vmem:[#allocation7 + $0x18] sm:$0xf]
    %v153 = vld [vmem:[#allocation7 + $0x1c] sm:$0xf]
    %v154 = vld [vmem:[#allocation7 + $0x20] sm:$0xf]
    %v155 = vld [vmem:[#allocation7 + $0x24] sm:$0xf]
    %v156 = vld [vmem:[#allocation7 + $0x28] sm:$0xf]
    %v157 = vld [vmem:[#allocation7 + $0x2c] sm:$0xf]
    %v158 = vld [vmem:[#allocation7 + $0x30] sm:$0xf]
    %v159 = vld [vmem:[#allocation7 + $0x34] sm:$0xf]
    %v160 = vld [vmem:[#allocation7 + $0x38] sm:$0xf]
    %v161 = vld [vmem:[#allocation7 + $0x3c] sm:$0xf]
    %v162 = vld [vmem:[%s4] sm:$0x1]
    %v164 = vlaneseq
    %v165 = vshrl.u32 %v164, 7
    %v166 = vsub.s32 0, %v165
    %v167 = vrot.slane %v162, %v166
    %v185 = vunpack.c.l.b16 %v146
    %v186 = vunpack.c.l.b16 %v147
    %v187 = vunpack.c.l.b16 %v148
    %v188 = vunpack.c.l.b16 %v149
    %v189 = vunpack.c.l.b16 %v150
    %v190 = vunpack.c.l.b16 %v151
    %v191 = vunpack.c.l.b16 %v152
    %v192 = vunpack.c.l.b16 %v153
    %v193 = vunpack.c.l.b16 %v154
    %v194 = vunpack.c.l.b16 %v155
    %v195 = vunpack.c.l.b16 %v156
    %v196 = vunpack.c.l.b16 %v157
    %v197 = vunpack.c.l.b16 %v158
    %v198 = vunpack.c.l.b16 %v159
    %v199 = vunpack.c.l.b16 %v160
    %v200 = vunpack.c.l.b16 %v161
    %v201 = vpack.c.b16 %v186, %v185
    %v202 = vpack.c.b16 %v188, %v187
    %v203 = vpack.c.b16 %v190, %v189
    %v204 = vpack.c.b16 %v192, %v191
    %v205 = vpack.c.b16 %v194, %v193
    %v206 = vpack.c.b16 %v196, %v195
    %v207 = vpack.c.b16 %v198, %v197
    %v208 = vpack.c.b16 %v200, %v199
    %217 = vmatprep.subr.bf16.mxu0 0
    %218 = vmatpush1.bf16.msra.mxu0 %v208
    %219 = vmatprep.subr.bf16.mxu0 0
    %220 = vmatpush1.bf16.msra.mxu0 %v207
    %221 = vmatprep.subr.bf16.mxu0 0
    %222 = vmatpush1.bf16.msra.mxu0 %v206
    %223 = vmatprep.subr.bf16.mxu0 0
    %224 = vmatpush1.bf16.msra.mxu0 %v205
    %225 = vmatprep.subr.bf16.mxu0 0
    %226 = vmatpush1.bf16.msra.mxu0 %v204
    %227 = vmatprep.subr.bf16.mxu0 0
    %228 = vmatpush1.bf16.msra.mxu0 %v203
    %229 = vmatprep.subr.bf16.mxu0 0
    %230 = vmatpush1.bf16.msra.mxu0 %v202
    %231 = vmatprep.subr.bf16.mxu0 0
    %232 = vmatpush1.bf16.msra.mxu0 %v201
    %233 = vmatprep.subr.bf16.mxu0 0
    %234 = vmatpush2.bf16.msra.mxu0 0
    %235 = vmatprep.subr.bf16.mxu0 0
    %236 = vmatpush2.bf16.msra.mxu0 0
    %237 = vmatprep.subr.bf16.mxu0 0
    %238 = vmatpush2.bf16.msra.mxu0 0
    %239 = vmatprep.subr.bf16.mxu0 0
    %240 = vmatpush2.bf16.msra.mxu0 0
    %241 = vmatprep.subr.bf16.mxu0 0
    %242 = vmatpush2.bf16.msra.mxu0 0
    %243 = vmatprep.subr.bf16.mxu0 0
    %244 = vmatpush2.bf16.msra.mxu0 0
    %245 = vmatprep.subr.bf16.mxu0 0
    %246 = vmatpush2.bf16.msra.mxu0 0
    %247 = vmatprep.subr.bf16.mxu0 0
    %248 = vmatpush2.bf16.msra.mxu0 0
    %249 = vmatprep.mubr.bf16.mxu0 0
    %250 = vmatmul.mubr.bf16.gmra.mxu0 %v145
    %v251 = vpop.f32.mrf.mxu0
    %v252 = vadd.f32 %v167, %v251
    %v253 = vpop.f32.mrf.mxu0
    %v254 = vpop.f32.mrf.mxu0
    %v255 = vpop.f32.mrf.mxu0
    %256 = vdwg.mxu0
    %vm257 = vcmp.gt.f32.partialorder %v252, 0.0
    %v258 = vmul.f32 %v252, 0.01
    %v259 = vsel %vm257, %v252, %v258
    %v260 = vpack.c.bf16 %v259, %v259
    %v261 = vld [vmem:[#allocation8] sm:$0xf]
    %v262 = vld [vmem:[#allocation8 + $0x4] sm:$0xf]
    %v263 = vld [vmem:[#allocation8 + $0x8] sm:$0xf]
    %v264 = vld [vmem:[#allocation8 + $0xc] sm:$0xf]
    %v265 = vld [vmem:[#allocation8 + $0x10] sm:$0xf]
    %v266 = vld [vmem:[#allocation8 + $0x14] sm:$0xf]
    %v267 = vld [vmem:[#allocation8 + $0x18] sm:$0xf]
    %v268 = vld [vmem:[#allocation8 + $0x1c] sm:$0xf]
    %v269 = vld [vmem:[#allocation8 + $0x20] sm:$0xf]
    %v270 = vld [vmem:[#allocation8 + $0x24] sm:$0xf]
    %v271 = vld [vmem:[#allocation8 + $0x28] sm:$0xf]
    %v272 = vld [vmem:[#allocation8 + $0x2c] sm:$0xf]
    %v273 = vld [vmem:[#allocation8 + $0x30] sm:$0xf]
    %v274 = vld [vmem:[#allocation8 + $0x34] sm:$0xf]
    %v275 = vld [vmem:[#allocation8 + $0x38] sm:$0xf]
    %v276 = vld [vmem:[#allocation8 + $0x3c] sm:$0xf]
    %v277 = vld [vmem:[%s6] sm:$0x1]
    %v279 = vlaneseq
    %v280 = vshrl.u32 %v279, 7
    %v281 = vsub.s32 0, %v280
    %v282 = vrot.slane %v277, %v281
    %v300 = vunpack.c.l.b16 %v261
    %v301 = vunpack.c.l.b16 %v262
    %v302 = vunpack.c.l.b16 %v263
    %v303 = vunpack.c.l.b16 %v264
    %v304 = vunpack.c.l.b16 %v265
    %v305 = vunpack.c.l.b16 %v266
    %v306 = vunpack.c.l.b16 %v267
    %v307 = vunpack.c.l.b16 %v268
    %v308 = vunpack.c.l.b16 %v269
    %v309 = vunpack.c.l.b16 %v270
    %v310 = vunpack.c.l.b16 %v271
    %v311 = vunpack.c.l.b16 %v272
    %v312 = vunpack.c.l.b16 %v273
    %v313 = vunpack.c.l.b16 %v274
    %v314 = vunpack.c.l.b16 %v275
    %v315 = vunpack.c.l.b16 %v276
    %v316 = vpack.c.b16 %v301, %v300
    %v317 = vpack.c.b16 %v303, %v302
    %v318 = vpack.c.b16 %v305, %v304
    %v319 = vpack.c.b16 %v307, %v306
    %v320 = vpack.c.b16 %v309, %v308
    %v321 = vpack.c.b16 %v311, %v310
    %v322 = vpack.c.b16 %v313, %v312
    %v323 = vpack.c.b16 %v315, %v314
    %332 = vmatprep.subr.bf16.mxu0 0
    %333 = vmatpush1.bf16.msra.mxu0 %v323
    %334 = vmatprep.subr.bf16.mxu0 0
    %335 = vmatpush1.bf16.msra.mxu0 %v322
    %336 = vmatprep.subr.bf16.mxu0 0
    %337 = vmatpush1.bf16.msra.mxu0 %v321
    %338 = vmatprep.subr.bf16.mxu0 0
    %339 = vmatpush1.bf16.msra.mxu0 %v320
    %340 = vmatprep.subr.bf16.mxu0 0
    %341 = vmatpush1.bf16.msra.mxu0 %v319
    %342 = vmatprep.subr.bf16.mxu0 0
    %343 = vmatpush1.bf16.msra.mxu0 %v318
    %344 = vmatprep.subr.bf16.mxu0 0
    %345 = vmatpush1.bf16.msra.mxu0 %v317
    %346 = vmatprep.subr.bf16.mxu0 0
    %347 = vmatpush1.bf16.msra.mxu0 %v316
    %348 = vmatprep.subr.bf16.mxu0 0
    %349 = vmatpush2.bf16.msra.mxu0 0
    %350 = vmatprep.subr.bf16.mxu0 0
    %351 = vmatpush2.bf16.msra.mxu0 0
    %352 = vmatprep.subr.bf16.mxu0 0
    %353 = vmatpush2.bf16.msra.mxu0 0
    %354 = vmatprep.subr.bf16.mxu0 0
    %355 = vmatpush2.bf16.msra.mxu0 0
    %356 = vmatprep.subr.bf16.mxu0 0
    %357 = vmatpush2.bf16.msra.mxu0 0
    %358 = vmatprep.subr.bf16.mxu0 0
    %359 = vmatpush2.bf16.msra.mxu0 0
    %360 = vmatprep.subr.bf16.mxu0 0
    %361 = vmatpush2.bf16.msra.mxu0 0
    %362 = vmatprep.subr.bf16.mxu0 0
    %363 = vmatpush2.bf16.msra.mxu0 0
    %364 = vmatprep.mubr.bf16.mxu0 0
    %365 = vmatmul.mubr.bf16.gmra.mxu0 %v260
    %v366 = vpop.f32.mrf.mxu0
    %v367 = vadd.f32 %v282, %v366
    %v368 = vpop.f32.mrf.mxu0
    %v369 = vpop.f32.mrf.mxu0
    %v370 = vpop.f32.mrf.mxu0
    %371 = vdwg.mxu0
    %v372 = vpack.c.bf16 %v367, %v367
    %373 = vst [vmem:[#allocation10] sm:$0xf] %v372
    // Predicated region
    $region46: #{tpu_custom_call.1} parent=1 // pred_check
      _
    $region47: #{tpu_custom_call.1} parent=1 // pred_check_branch
      %375 = sbr.rel (0) target = $region49
    $region48: #{tpu_custom_call.1} parent=1 // pred_region
      %s377 = ssub.s32 64, 64
      %378 = vsyncadd [#allocation4], %s377
      %s380 = sshll.u32 [#allocation10], 4
      %s381 = int_to_ptr.vmem [resolvable:$true] %s380
      %383 = dma.vmem_to_hbm [thread:$0]  %s381, 64, %s7, [#allocation4]
    $region49: #{tpu_custom_call.1} parent=1 // pred_fallthru
      _
    // Predicated region
    $region50: #{tpu_custom_call.1} parent=1 // pred_check
      _
    $region51: #{tpu_custom_call.1} parent=1 // pred_check_branch
      %385 = sbr.rel (0) target = $region53
    $region52: #{tpu_custom_call.1} parent=1 // pred_region
      %386 = dma.done [#allocation4], 64
    $region53: #{tpu_custom_call.1} parent=1 // pred_fallthru
      _
    %387 = vsyncpa [#allocation3], 1
    %388 = vsyncpa [#allocation6], 1
    %389 = vsyncpa [#allocation9], 1
    %390 = vsyncpa [#allocation4], 1

</llo_original>
